<compile_context>
chip_gen: v5e
topology: v5e:2x2
jax: 0.10.0
libtpu: 0.0.40
codegen_flags: <defaults>
</compile_context>

<pallas_src>
import jax
import jax.numpy as jnp
from jax.experimental import pallas as pl
from jax.experimental.pallas import tpu as pltpu


def _round_up(x, m):
    return ((x + m - 1) // m) * m


def _tpu_config():
    """(physical VMEM bytes, TensorCores per chip) with safe fallbacks."""
    kind = ""
    try:
        kind = jax.devices()[0].device_kind.lower()
    except Exception:
        pass
    n_cores = 2 if "v7" in kind else 1          # v5e / v6e: 1 TC per chip
    vmem_bytes = None
    try:
        vmem_bytes = int(pltpu.get_tpu_info().vmem_capacity_bytes)
    except Exception:
        vmem_bytes = None
    if not vmem_bytes or vmem_bytes < (8 << 20):
        vmem_bytes = (64 << 20) if "v7" in kind else (128 << 20)
    return vmem_bytes, n_cores


# ----------------------------- kernels --------------------------------------


def _se_kernel(x_ref, w1_ref, w2_ref, o_ref):
    # x_ref / o_ref block: (Bt, C, HW) with HW = true spatial size (unpadded;
    # Mosaic masks the ragged trailing vreg).  w1_ref: (C, Cr) pre-scaled by
    # 1/HW; w2_ref: (Cr, C); both f32.

    # squeeze: pooled sums over the spatial (lane) axis; f32 cast folded in.
    y = jnp.sum(x_ref[...].astype(jnp.float32), axis=-1)               # (Bt, C)

    # excitation: fc1 -> relu -> fc2 -> sigmoid (tiny; large MXU/EUP slack).
    h = jnp.maximum(
        jnp.dot(y, w1_ref[...], preferred_element_type=jnp.float32), 0.0)
    s = jax.nn.sigmoid(
        jnp.dot(h, w2_ref[...], preferred_element_type=jnp.float32))   # (Bt, C)

    # scale: broadcast the per-(batch, channel) gate over spatial.
    o_ref[...] = x_ref[...] * s.astype(o_ref.dtype)[:, :, None]


def _pool_kernel(x_ref, p_ref):
    # x_ref block: (1, Ct, HW) -> pooled sums, block (1, 1, 1, Ct).
    s = jnp.sum(x_ref[...].astype(jnp.float32), axis=-1)               # (1, Ct)
    p_ref[...] = s.reshape(p_ref.shape)


def _gate_kernel(p_ref, w1_ref, w2_ref, g_ref):
    # p_ref: (B, C) pooled sums; w1 already holds the 1/HW of the avg pool.
    h = jnp.maximum(
        jnp.dot(p_ref[...], w1_ref[...], preferred_element_type=jnp.float32), 0.0)
    g_ref[...] = jax.nn.sigmoid(
        jnp.dot(h, w2_ref[...], preferred_element_type=jnp.float32))


def _scale_kernel(x_ref, g_ref, o_ref):
    # x_ref block: (1, Ct, HW); g_ref block: (1, 1, 1, Ct).
    g = g_ref[0, 0]                                                    # (1, Ct)
    o_ref[...] = x_ref[...] * g.astype(o_ref.dtype)[:, :, None]


# ----------------------------- wrappers -------------------------------------


def _se_two_pass(x_flat, w1f, w2f, vmem_bytes, cap, tile_budget, channel_chunk):
    """Fallback when a single (1, C, HW) tile would not fit comfortably in VMEM.

    pool (channel-chunked) -> tiny gate MLP -> scale (channel-chunked).
    Costs one extra read of x vs. the single-pass path.
    """
    b, c, hw = x_flat.shape
    itemsize = jnp.dtype(x_flat.dtype).itemsize
    hw_lane = _round_up(hw, 128)

    # Channel-chunk Ct: second-to-last block dim must be a multiple of 8 or
    # the full C; pick the largest such divisor of C whose (Ct, HW) slab fits
    # the tile budget.
    if channel_chunk is not None:
        ct = int(channel_chunk)
        assert c % ct == 0 and (ct % 8 == 0 or ct == c)
    elif c % 8 == 0:
        cands = [d for d in range(8, c + 1, 8) if c % d == 0]
        fits = [d for d in cands if d * hw_lane * itemsize <= tile_budget]
        ct = max(fits) if fits else min(cands)
    else:
        # TODO(synk): channel counts not divisible by 8 combined with huge H*W
        # would additionally need spatial-axis chunking with masked pooling.
        ct = c
    n_c = c // ct

    chunk_bytes = _round_up(ct, 8) * hw_lane * itemsize
    vmem_pool = int(min(max(3 * chunk_bytes + (2 << 20), 16 << 20), cap))
    vmem_scale = int(min(max(4 * chunk_bytes + (2 << 20), 16 << 20), cap))

    # Pass 1: pooled sums per (batch, channel-chunk).
    pooled4 = pl.pallas_call(
        _pool_kernel,
        out_shape=jax.ShapeDtypeStruct((b, n_c, 1, ct), jnp.float32),
        grid_spec=pltpu.PrefetchScalarGridSpec(
            num_scalar_prefetch=0,
            grid=(b, n_c),
            in_specs=[pl.BlockSpec((1, ct, hw), lambda i, j: (i, j, 0))],
            out_specs=pl.BlockSpec((1, 1, 1, ct), lambda i, j: (i, j, 0, 0)),
        ),
        compiler_params=pltpu.CompilerParams(
            dimension_semantics=("parallel", "arbitrary"),
            vmem_limit_bytes=vmem_pool),
    )(x_flat)

    # Pass 2: tiny excitation MLP on the (B, C) pooled sums (one grid step).
    pooled = pooled4.reshape(b, c)
    cr = w1f.shape[1]
    gate = pl.pallas_call(
        _gate_kernel,
        out_shape=jax.ShapeDtypeStruct((b, c), jnp.float32),
        grid_spec=pltpu.PrefetchScalarGridSpec(
            num_scalar_prefetch=0,
            grid=(1,),
            in_specs=[
                pl.BlockSpec((b, c), lambda i: (0, 0)),
                pl.BlockSpec((c, cr), lambda i: (0, 0)),
                pl.BlockSpec((cr, c), lambda i: (0, 0)),
            ],
            out_specs=pl.BlockSpec((b, c), lambda i: (0, 0)),
        ),
        compiler_params=pltpu.CompilerParams(
            dimension_semantics=("arbitrary",),
            vmem_limit_bytes=16 << 20),
    )(pooled, w1f, w2f)

    # Pass 3: scale x by the broadcast gate, chunked the same way as pass 1.
    gate4 = gate.reshape(b, n_c, 1, ct)
    out_flat = pl.pallas_call(
        _scale_kernel,
        out_shape=jax.ShapeDtypeStruct((b, c, hw), x_flat.dtype),
        grid_spec=pltpu.PrefetchScalarGridSpec(
            num_scalar_prefetch=0,
            grid=(b, n_c),
            in_specs=[
                pl.BlockSpec((1, ct, hw), lambda i, j: (i, j, 0)),
                pl.BlockSpec((1, 1, 1, ct), lambda i, j: (i, j, 0, 0)),
            ],
            out_specs=pl.BlockSpec((1, ct, hw), lambda i, j: (i, j, 0)),
        ),
        compiler_params=pltpu.CompilerParams(
            dimension_semantics=("parallel", "arbitrary"),
            vmem_limit_bytes=vmem_scale),
    )(x_flat, gate4)

    return out_flat


def se_layer(x, w1, w2, *, donate_x=False, force_two_pass=False,
             channel_chunk=None):
    """SELayer forward.

    x:  (B, C, H, W) NCHW.
    w1: (C, C//r)  first Linear weight stored (in_features, out_features), no bias.
    w2: (C//r, C)  second Linear weight, no bias.
    donate_x: alias x's buffer to the output (only if the caller drops x).
    """
    b, c, h, w = x.shape
    hw = h * w
    itemsize = jnp.dtype(x.dtype).itemsize

    # Fold the 1/HW of the average pool into w1 so the kernel only needs a sum.
    w1f = w1.astype(jnp.float32) / jnp.float32(hw)
    w2f = w2.astype(jnp.float32)

    vmem_bytes, n_cores = _tpu_config()
    cap = (3 * vmem_bytes) // 4                 # never ask for >75% of physical VMEM
    tile_budget = vmem_bytes // 10              # ~6.4 MiB (v7x) / ~12.8 MiB (v5e/v6e)

    # In-VMEM footprint of one batch element of the flattened (C, HW) slab.
    per_batch_bytes = _round_up(c, 8) * _round_up(hw, 128) * itemsize

    x_flat = x.reshape(b, c, hw)                # contiguous collapse: free under jit

    if force_two_pass or per_batch_bytes > vmem_bytes // 6:
        out_flat = _se_two_pass(x_flat, w1f, w2f, vmem_bytes, cap, tile_budget,
                                channel_chunk)
        return out_flat.reshape(b, c, h, w)

    # --- single-pass path: each grid step handles bt whole batch elements ---
    bt = max(1, min(b, tile_budget // max(per_batch_bytes, 1)))
    min_steps = 4 * n_cores                     # >=4 grid steps per TensorCore
    if b >= min_steps:
        bt = min(bt, max(1, b // min_steps))
    elif n_cores > 1 and b >= n_cores:
        bt = min(bt, max(1, b // n_cores))      # give every v7x core some work
    while b % bt:                               # keep bt a divisor of B: no batch
        bt -= 1                                 # padding, no ragged last block
    grid = b // bt

    tile_bytes = bt * per_batch_bytes
    w_bytes = 4 * (w1f.size + w2f.size) * 4     # double-buffered weight blocks
    need = 4 * tile_bytes + w_bytes + (2 << 20)  # in+out, double-buffered + headroom
    vmem_limit = int(min(max(need, 16 << 20), cap))

    out_flat = pl.pallas_call(
        _se_kernel,
        out_shape=jax.ShapeDtypeStruct((b, c, hw), x.dtype),
        grid_spec=pltpu.PrefetchScalarGridSpec(
            num_scalar_prefetch=0,
            grid=(grid,),
            in_specs=[
                pl.BlockSpec((bt, c, hw), lambda i: (i, 0, 0)),
                pl.BlockSpec((c, w1.shape[1]), lambda i: (0, 0)),
                pl.BlockSpec((w2.shape[0], c), lambda i: (0, 0)),
            ],
            out_specs=pl.BlockSpec((bt, c, hw), lambda i: (i, 0, 0)),
        ),
        compiler_params=pltpu.CompilerParams(
            dimension_semantics=("parallel",),
            vmem_limit_bytes=vmem_limit),
        input_output_aliases=({0: 0} if donate_x else {}),
    )(x_flat, w1f, w2f)

    return out_flat.reshape(b, c, h, w)


def se_layer_ref(x, w1, w2):
    y = jnp.mean(x.astype(jnp.float32), axis=(2, 3))                   # (B, C)
    y = jnp.maximum(y @ w1.astype(jnp.float32), 0.0)
    y = jax.nn.sigmoid(y @ w2.astype(jnp.float32))
    return (x.astype(jnp.float32) * y[:, :, None, None]).astype(x.dtype)


if __name__ == "__main__":
    # Small shapes consistent with SELayer(channel=32, reduction=16).
    B, C, reduction = 2, 32, 16
    Cr = C // reduction

    key = jax.random.PRNGKey(0)
    kx, k1, k2, kx2 = jax.random.split(key, 4)

    # Linear weights stored (in_features, out_features), no bias.
    w1 = jax.random.normal(k1, (C, Cr), dtype=jnp.float32) * 0.1
    w2 = jax.random.normal(k2, (Cr, C), dtype=jnp.float32) * 0.1

    se_fn = jax.jit(se_layer,
                    static_argnames=("donate_x", "force_two_pass", "channel_chunk"))

    # 1) single-pass path, 16x16 spatial (H*W multiple of 128).
    x = jax.random.normal(kx, (B, C, 16, 16), dtype=jnp.float32)
    out = jax.block_until_ready(se_fn(x, w1, w2))
    ref = jax.block_until_ready(se_layer_ref(x, w1, w2))
    assert out.shape == x.shape
    assert jnp.allclose(out, ref, atol=1e-5, rtol=1e-5)

    # 2) single-pass path, ragged spatial (7*7 = 49 lanes, no padding in HBM).
    x2 = jax.random.normal(kx2, (B, C, 7, 7), dtype=jnp.float32)
    out2 = jax.block_until_ready(se_fn(x2, w1, w2))
    ref2 = jax.block_until_ready(se_layer_ref(x2, w1, w2))
    assert jnp.allclose(out2, ref2, atol=1e-5, rtol=1e-5)

    # 3) forced two-pass fallback (large-activation path), channel-chunked.
    out3 = jax.block_until_ready(
        se_fn(x, w1, w2, force_two_pass=True, channel_chunk=8))
    assert jnp.allclose(out3, ref, atol=1e-5, rtol=1e-5)

    print("KERNEL_OK")
</pallas_src>

<mosaic_0001>
module attributes {stable_mosaic.version = 11 : i64} {
  func.func @_se_kernel(%arg0: i32, %arg1: memref<2x32x256xf32, #tpu.memory_space<vmem>>, %arg2: memref<32x2xf32, #tpu.memory_space<vmem>>, %arg3: memref<2x32xf32, #tpu.memory_space<vmem>>, %arg4: memref<2x32x256xf32, #tpu.memory_space<vmem>>) attributes {dimension_semantics = [#tpu.dimension_semantics<parallel>], iteration_bounds = array<i64: 1>, scalar_prefetch = 0 : i64, scratch_operands = 0 : i64, tpu.core_type = #tpu.core_type<tc>, window_params = [{transform_indices = @transform_0, window_bounds = array<i64: 2, 32, 256>}, {pipeline_mode = #tpu.pipeline_mode<synchronous>, transform_indices = @transform_1, window_bounds = array<i64: 32, 2>}, {pipeline_mode = #tpu.pipeline_mode<synchronous>, transform_indices = @transform_2, window_bounds = array<i64: 2, 32>}, {transform_indices = @transform_3, window_bounds = array<i64: 2, 32, 256>}]} {
    %c0 = arith.constant 0 : index
    %c0_0 = arith.constant 0 : index
    %c0_1 = arith.constant 0 : index
    %0 = vector.load %arg1[%c0, %c0_0, %c0_1] : memref<2x32x256xf32, #tpu.memory_space<vmem>>, vector<2x32x256xf32>
    %cst = arith.constant dense<0.000000e+00> : vector<2x32xf32>
    %1 = vector.multi_reduction <add>, %0, %cst [2] : vector<2x32x256xf32> to vector<2x32xf32>
    %c0_2 = arith.constant 0 : index
    %c0_3 = arith.constant 0 : index
    %2 = vector.load %arg2[%c0_2, %c0_3] : memref<32x2xf32, #tpu.memory_space<vmem>>, vector<32x2xf32>
    %cst_4 = arith.constant dense<0.000000e+00> : vector<2x2xf32>
    %3 = tpu.matmul %1, %2, %cst_4 {dimension_numbers = #tpu.dot_dimension_numbers<[1], [0], [0], [1], [0, 0, 1, 1], [], []>} : vector<2x32xf32>, vector<32x2xf32>, vector<2x2xf32> -> vector<2x2xf32>
    %cst_5 = arith.constant 0.000000e+00 : f32
    %4 = vector.broadcast %cst_5 : f32 to vector<2x2xf32>
    %5 = arith.maximumf %3, %4 : vector<2x2xf32>
    %c0_6 = arith.constant 0 : index
    %c0_7 = arith.constant 0 : index
    %6 = vector.load %arg3[%c0_6, %c0_7] : memref<2x32xf32, #tpu.memory_space<vmem>>, vector<2x32xf32>
    %cst_8 = arith.constant dense<0.000000e+00> : vector<2x32xf32>
    %7 = tpu.matmul %5, %6, %cst_8 {dimension_numbers = #tpu.dot_dimension_numbers<[1], [0], [0], [1], [0, 0, 1, 1], [], []>} : vector<2x2xf32>, vector<2x32xf32>, vector<2x32xf32> -> vector<2x32xf32>
    %8 = arith.negf %7 : vector<2x32xf32>
    %9 = math.exp %8 : vector<2x32xf32>
    %cst_9 = arith.constant 1.000000e+00 : f32
    %10 = vector.broadcast %cst_9 : f32 to vector<2x32xf32>
    %11 = arith.addf %10, %9 : vector<2x32xf32>
    %12 = arith.divf %10, %11 : vector<2x32xf32>
    %c0_10 = arith.constant 0 : index
    %c0_11 = arith.constant 0 : index
    %c0_12 = arith.constant 0 : index
    %13 = vector.load %arg1[%c0_10, %c0_11, %c0_12] : memref<2x32x256xf32, #tpu.memory_space<vmem>>, vector<2x32x256xf32>
    %14 = vector.shape_cast %12 : vector<2x32xf32> to vector<2x32x1xf32>
    %15 = vector.broadcast %14 : vector<2x32x1xf32> to vector<2x32x256xf32>
    %16 = arith.mulf %13, %15 : vector<2x32x256xf32>
    %c0_13 = arith.constant 0 : index
    %c0_14 = arith.constant 0 : index
    %c0_15 = arith.constant 0 : index
    %17 = vector.load %arg4[%c0_13, %c0_14, %c0_15] : memref<2x32x256xf32, #tpu.memory_space<vmem>>, vector<2x32x256xf32>
    tpu.vector_store %arg4[%c0_13, %c0_14, %c0_15], %16 {strides = array<i32>} : memref<2x32x256xf32, #tpu.memory_space<vmem>>, vector<2x32x256xf32>,
    return
  }
  func.func @transform_0(%arg0: i32) -> (i32, i32, i32) {
    %c0_i32 = arith.constant 0 : i32
    %c0_i32_0 = arith.constant 0 : i32
    %c0_i32_1 = arith.constant 0 : i32
    return %arg0, %c0_i32, %c0_i32_0 : i32, i32, i32
  }
  func.func @transform_1(%arg0: i32) -> (i32, i32) {
    %c0_i32 = arith.constant 0 : i32
    %c0_i32_0 = arith.constant 0 : i32
    %c0_i32_1 = arith.constant 0 : i32
    return %c0_i32, %c0_i32_0 : i32, i32
  }
  func.func @transform_2(%arg0: i32) -> (i32, i32) {
    %c0_i32 = arith.constant 0 : i32
    %c0_i32_0 = arith.constant 0 : i32
    %c0_i32_1 = arith.constant 0 : i32
    return %c0_i32, %c0_i32_0 : i32, i32
  }
  func.func @transform_3(%arg0: i32) -> (i32, i32, i32) {
    %c0_i32 = arith.constant 0 : i32
    %c0_i32_0 = arith.constant 0 : i32
    %c0_i32_1 = arith.constant 0 : i32
    return %arg0, %c0_i32, %c0_i32_0 : i32, i32, i32
  }
}

</mosaic_0001>

<llo_original>
// kernel: se_layer.1
$region0: #{se_layer.1}
  #allocation0 [shape = 'u32[]', space=smem, size = 0x4, offset = 0x4, fixed_abs, tag = 'smem constant byte address 0x4 - core index']
  #allocation1 [shape = 'u32[72,128]{1,0:T(1,128)}', space=vmem, size = 0x9000, scoped, tag = 'internal scratch']
  %s0 = inlined_call_operand.vmem [shape: f32[2,32,256], index: 0, kind: input, shape index: {}]
  %s1 = inlined_call_operand.vmem [shape: f32[32,2], index: 1, kind: input, shape index: {}]
  %s2 = inlined_call_operand.vmem [shape: f32[2,32], index: 2, kind: input, shape index: {}]
  %s3 = inlined_call_operand.vmem [shape: f32[2,32,256], index: 3, kind: output, shape index: {}]
  %s4 = sld [smem:[#allocation0]]
  $region22: #{se_layer.1} parent=0
    _
  %s6 = ssub.s32 1, %s4
  %s7 = scalar_select 0, %s6, %s4
  // Predicated region
  $region2: #{se_layer.1} parent=0 // pred_check
    _
  $region3: #{se_layer.1} parent=0 // pred_check_branch
    %9 = sbr.rel (0) target = $region5
  $region4: #{se_layer.1} parent=0 // pred_region
    _
  $region5: #{se_layer.1} parent=0 // pred_fallthru
    _
  // Predicated region
  $region6: #{se_layer.1} parent=0 // pred_check
    _
  $region7: #{se_layer.1} parent=0 // pred_check_branch
    %11 = sbr.rel (0) target = $region9
  $region8: #{se_layer.1} parent=0 // pred_region
    _
  $region9: #{se_layer.1} parent=0 // pred_fallthru
    _
  // Predicated region
  $region10: #{se_layer.1} parent=0 // pred_check
    _
  $region11: #{se_layer.1} parent=0 // pred_check_branch
    %13 = sbr.rel (0) target = $region13
  $region12: #{se_layer.1} parent=0 // pred_region
    _
  $region13: #{se_layer.1} parent=0 // pred_fallthru
    _
  %v14 = vld [vmem:[%s0] sm:$0xff]
  %v15 = vld [vmem:[%s0 + $0x8] sm:$0xff]
  %v16 = vld [vmem:[%s0 + $0x10] sm:$0xff]
  %v17 = vld [vmem:[%s0 + $0x18] sm:$0xff]
  %v18 = vld [vmem:[%s0 + $0x20] sm:$0xff]
  %v19 = vld [vmem:[%s0 + $0x28] sm:$0xff]
  %v20 = vld [vmem:[%s0 + $0x30] sm:$0xff]
  %v21 = vld [vmem:[%s0 + $0x38] sm:$0xff]
  %v22 = vld [vmem:[%s0 + $0x40] sm:$0xff]
  %v23 = vld [vmem:[%s0 + $0x48] sm:$0xff]
  %v24 = vld [vmem:[%s0 + $0x50] sm:$0xff]
  %v25 = vld [vmem:[%s0 + $0x58] sm:$0xff]
  %v26 = vld [vmem:[%s0 + $0x60] sm:$0xff]
  %v27 = vld [vmem:[%s0 + $0x68] sm:$0xff]
  %v28 = vld [vmem:[%s0 + $0x70] sm:$0xff]
  %v29 = vld [vmem:[%s0 + $0x78] sm:$0xff]
  %v30 = vadd.f32 %v14, %v15
  %31 = vadd.xlane.f32.xlu0 %v30
  %v32 = vpop.xlane.xlu0 %31
  %v33 = vadd.f32 %v16, %v17
  %34 = vadd.xlane.f32.xlu0 %v33
  %v35 = vpop.xlane.xlu0 %34
  %v36 = vadd.f32 %v18, %v19
  %37 = vadd.xlane.f32.xlu0 %v36
  %v38 = vpop.xlane.xlu0 %37
  %v39 = vadd.f32 %v20, %v21
  %40 = vadd.xlane.f32.xlu0 %v39
  %v41 = vpop.xlane.xlu0 %40
  %v42 = vadd.f32 %v22, %v23
  %43 = vadd.xlane.f32.xlu0 %v42
  %v44 = vpop.xlane.xlu0 %43
  %v45 = vadd.f32 %v24, %v25
  %46 = vadd.xlane.f32.xlu0 %v45
  %v47 = vpop.xlane.xlu0 %46
  %v48 = vadd.f32 %v26, %v27
  %49 = vadd.xlane.f32.xlu0 %v48
  %v50 = vpop.xlane.xlu0 %49
  %v51 = vadd.f32 %v28, %v29
  %52 = vadd.xlane.f32.xlu0 %v51
  %v53 = vpop.xlane.xlu0 %52
  %v54 = vld [vmem:[%s1] sm:$0xff]
  %v55 = vld [vmem:[%s1 + $0x8] sm:$0xff]
  %v56 = vld [vmem:[%s1 + $0x10] sm:$0xff]
  %v57 = vld [vmem:[%s1 + $0x18] sm:$0xff]
  %v66 = vlaneseq
  %v67 = vand.u32 %v66, 127
  %v68 = vperm.slane %v32, %v67
  %v69 = vadd.s32 %v67, 4294967288
  %v70 = vperm.slane %v35, %v69
  %vm71 = vcmask 130112
  %v72 = vsel %vm71, %v70, %v68
  %v73 = vadd.s32 %v67, 4294967280
  %v74 = vperm.slane %v38, %v73
  %vm75 = vcmask 195712
  %v76 = vsel %vm75, %v74, %v72
  %v77 = vadd.s32 %v67, 4294967272
  %v78 = vperm.slane %v41, %v77
  %vm79 = vcmask 261312
  %v80 = vsel %vm79, %v78, %v76
  %v81 = vperm.slane %v44, %v67
  %v82 = vperm.slane %v47, %v69
  %v83 = vsel %vm71, %v82, %v81
  %v84 = vperm.slane %v50, %v73
  %v85 = vsel %vm75, %v84, %v83
  %v86 = vperm.slane %v53, %v77
  %v87 = vsel %vm79, %v86, %v85
  %vm88 = vcmask 1041409
  %v89 = vsel %vm88, %v87, %v80
  %vm90 = vcmask 261120
  %v91 = vsel %vm90, %v89, 0
  %93 = vmatpush.msra.mxu0 0.0
  %94 = vmatpush.msra.mxu0 0.0
  %95 = vmatpush.msra.mxu0 0.0
  %96 = vmatpush.msra.mxu0 0.0
  %97 = vmatpush.msra.mxu0 0.0
  %98 = vmatpush.msra.mxu0 0.0
  %99 = vmatpush.msra.mxu0 0.0
  %100 = vmatpush.msra.mxu0 0.0
  %101 = vmatpush.msra.mxu0 0.0
  %102 = vmatpush.msra.mxu0 0.0
  %103 = vmatpush.msra.mxu0 0.0
  %104 = vmatpush.msra.mxu0 0.0
  %105 = vmatpush.msra.mxu0 %v57
  %106 = vmatpush.msra.mxu0 %v56
  %107 = vmatpush.msra.mxu0 %v55
  %108 = vmatpush.msra.mxu0 %v54
  %109 = vmatmul.f32.gmra.mxu0 %v91
  %v110 = vpop.f32.mrf.mxu0
  %v111 = vadd.f32 0.0, %v110
  %112 = vdwg.mxu0
  %v113 = vmax.f32 %v111, 0.0
  %v114 = vld [vmem:[%s2] sm:$0x3]
  %vm115 = vcmask 15360
  %v117 = vsel %vm115, %v113, 0
  %vm119 = vcmask 1041408
  %v121 = vsel %vm119, %v114, 0
  %123 = vmatpush.msra.mxu0 0.0
  %124 = vmatpush.msra.mxu0 0.0
  %125 = vmatpush.msra.mxu0 0.0
  %126 = vmatpush.msra.mxu0 0.0
  %127 = vmatpush.msra.mxu0 0.0
  %128 = vmatpush.msra.mxu0 0.0
  %129 = vmatpush.msra.mxu0 0.0
  %130 = vmatpush.msra.mxu0 0.0
  %131 = vmatpush.msra.mxu0 0.0
  %132 = vmatpush.msra.mxu0 0.0
  %133 = vmatpush.msra.mxu0 0.0
  %134 = vmatpush.msra.mxu0 0.0
  %135 = vmatpush.msra.mxu0 0.0
  %136 = vmatpush.msra.mxu0 0.0
  %137 = vmatpush.msra.mxu0 0.0
  %138 = vmatpush.msra.mxu0 %v121
  %139 = vmatmul.f32.gmra.mxu0 %v117
  %v140 = vpop.f32.mrf.mxu0
  %v141 = vadd.f32 0.0, %v140
  %142 = vdwg.mxu0
  %v143 = vxor.u32 %v141, 2147483648
  %v144 = vmul.f32 %v143, 1.442695
  %v145 = vpow.pop %v144
  %v146 = vadd.f32 %v145, 1.0
  %v147 = vrcp.pop %v146
  %v148 = vmul.f32 %v146, %v147
  %v149 = vsub.f32 1.0, %v148
  %v150 = vmul.f32 %v147, %v149
  %v151 = vadd.f32 %v147, %v150
  %vm152 = vweird.f32 %v146
  %vm153 = vweird.f32 %v147
  %vm154 = vmor %vm152, %vm153
  %v155 = vsel %vm154, %v147, %v151
  %v156 = vand.u32 2147483647, %v146
  %vm157 = vcmp.eq.f32.partialorder %v156, 8.507059e+37
  %v158 = vand.u32 %v146, 2147483648
  %v159 = vor.u32 1.1754944e-38, %v158
  %v160 = vsel %vm157, %v159, %v155
  %v161 = vmul.f32 1.0, %v160
  %v162 = vperm.slane %v161, 0
  %v163 = vlaneseq
  %v164 = vshrl.u32 %v163, 7
  %166 = vset.pattern.permute.xlu0 %v164
  %167 = vperm.xlu0 %166, %v162
  %v168 = vpop.permute.xlu0 %167
  %v169 = vlaneseq
  %v170 = vshrl.u32 %v169, 7
  %v171 = vadd.s32 %v170, 8
  %172 = vset.pattern.permute.xlu0 %v171
  %173 = vperm.xlu0 %172, %v162
  %v174 = vpop.permute.xlu0 %173
  %v175 = vlaneseq
  %v176 = vshrl.u32 %v175, 7
  %v177 = vadd.s32 %v176, 16
  %178 = vset.pattern.permute.xlu0 %v177
  %179 = vperm.xlu0 %178, %v162
  %v180 = vpop.permute.xlu0 %179
  %v181 = vlaneseq
  %v182 = vshrl.u32 %v181, 7
  %v183 = vadd.s32 %v182, 24
  %184 = vset.pattern.permute.xlu0 %v183
  %185 = vperm.xlu0 %184, %v162
  %v186 = vpop.permute.xlu0 %185
  %v187 = vperm.slane %v161, 1
  %v188 = vlaneseq
  %v189 = vshrl.u32 %v188, 7
  %191 = vset.pattern.permute.xlu0 %v189
  %192 = vperm.xlu0 %191, %v187
  %v193 = vpop.permute.xlu0 %192
  %v194 = vlaneseq
  %v195 = vshrl.u32 %v194, 7
  %v196 = vadd.s32 %v195, 8
  %197 = vset.pattern.permute.xlu0 %v196
  %198 = vperm.xlu0 %197, %v187
  %v199 = vpop.permute.xlu0 %198
  %v200 = vlaneseq
  %v201 = vshrl.u32 %v200, 7
  %v202 = vadd.s32 %v201, 16
  %203 = vset.pattern.permute.xlu0 %v202
  %204 = vperm.xlu0 %203, %v187
  %v205 = vpop.permute.xlu0 %204
  %v206 = vlaneseq
  %v207 = vshrl.u32 %v206, 7
  %v208 = vadd.s32 %v207, 24
  %209 = vset.pattern.permute.xlu0 %v208
  %210 = vperm.xlu0 %209, %v187
  %v211 = vpop.permute.xlu0 %210
  %v212 = vmul.f32 %v14, %v168
  %v213 = vmul.f32 %v15, %v168
  %v214 = vmul.f32 %v16, %v174
  %v215 = vmul.f32 %v17, %v174
  %v216 = vmul.f32 %v18, %v180
  %v217 = vmul.f32 %v19, %v180
  %v218 = vmul.f32 %v20, %v186
  %v219 = vmul.f32 %v21, %v186
  %v220 = vmul.f32 %v22, %v193
  %v221 = vmul.f32 %v23, %v193
  %v222 = vmul.f32 %v24, %v199
  %v223 = vmul.f32 %v25, %v199
  %v224 = vmul.f32 %v26, %v205
  %v225 = vmul.f32 %v27, %v205
  %v226 = vmul.f32 %v28, %v211
  %v227 = vmul.f32 %v29, %v211
  %228 = vst [vmem:[%s3] sm:$0xff] %v212
  %229 = vst [vmem:[%s3 + $0x8] sm:$0xff] %v213
  %230 = vst [vmem:[%s3 + $0x10] sm:$0xff] %v214
  %231 = vst [vmem:[%s3 + $0x18] sm:$0xff] %v215
  %232 = vst [vmem:[%s3 + $0x20] sm:$0xff] %v216
  %233 = vst [vmem:[%s3 + $0x28] sm:$0xff] %v217
  %234 = vst [vmem:[%s3 + $0x30] sm:$0xff] %v218
  %235 = vst [vmem:[%s3 + $0x38] sm:$0xff] %v219
  %236 = vst [vmem:[%s3 + $0x40] sm:$0xff] %v220
  %237 = vst [vmem:[%s3 + $0x48] sm:$0xff] %v221
  %238 = vst [vmem:[%s3 + $0x50] sm:$0xff] %v222
  %239 = vst [vmem:[%s3 + $0x58] sm:$0xff] %v223
  %240 = vst [vmem:[%s3 + $0x60] sm:$0xff] %v224
  %241 = vst [vmem:[%s3 + $0x68] sm:$0xff] %v225
  %242 = vst [vmem:[%s3 + $0x70] sm:$0xff] %v226
  %243 = vst [vmem:[%s3 + $0x78] sm:$0xff] %v227
  // Predicated region
  $region14: #{se_layer.1} parent=0 // pred_check
    _
  $region15: #{se_layer.1} parent=0 // pred_check_branch
    %245 = sbr.rel (0) target = $region17
  $region16: #{se_layer.1} parent=0 // pred_region
    _
  $region17: #{se_layer.1} parent=0 // pred_fallthru
    _
  // Predicated region
  $region18: #{se_layer.1} parent=0 // pred_check
    _
  $region19: #{se_layer.1} parent=0 // pred_check_branch
    %247 = sbr.rel (0) target = $region21
  $region20: #{se_layer.1} parent=0 // pred_region
    _
  $region21: #{se_layer.1} parent=0 // pred_fallthru
    _

</llo_original>
